<compile_context>
chip_gen: v6e
topology: v6e:2x2x1
jax: 0.10.0
libtpu: 0.0.40
codegen_flags: <defaults>
</compile_context>

<pallas_src>
import functools

import jax
import jax.numpy as jnp
from jax.experimental import pallas as pl
from jax.experimental.pallas import tpu as pltpu


# --------------------------------------------------------------------------
# Kernel
# --------------------------------------------------------------------------
def _a2c_fused_kernel(x_ref, w1x_ref, b1_ref, w2h_ref, b2_ref,
                      wo_ref, bo_ref, out_ref):
    half = b1_ref.shape[-1]            # 2*HP (static, a multiple of 128)
    x = x_ref[...]                     # [TM, D], compute dtype (bf16)

    # Single fused x-driven matmul: [TM, 4HP] = x @ [W1 | W2x]  (f32 accum).
    xw = jnp.dot(x, w1x_ref[...], preferred_element_type=jnp.float32)

    # Layer 1 (actor | critic fused). Bias add + ReLU in f32 on the VPU.
    h1 = jnp.maximum(xw[:, :half] + b1_ref[...], 0.0)          # [TM, 2HP]

    # Layer 2: h1 @ blockdiag(wa2h, wc2h) + (x-part precomputed in xw) + b2.
    h2 = jnp.maximum(
        jnp.dot(h1.astype(w2h_ref.dtype), w2h_ref[...],
                preferred_element_type=jnp.float32)
        + xw[:, half:] + b2_ref[...],
        0.0,
    )                                                           # [TM, 2HP]

    # Fused output head: lane-dense [TM, OP] store
    # (actor cols 0:O, critic col O, rest exactly zero).
    out_ref[...] = (
        jnp.dot(h2.astype(wo_ref.dtype), wo_ref[...],
                preferred_element_type=jnp.float32)
        + bo_ref[...]
    ).astype(out_ref.dtype)


# --------------------------------------------------------------------------
# Parameters (PyTorch Linear layout [out, in]) and one-time preparation
# --------------------------------------------------------------------------
def init_params(key, input_dim, hidden_dim, output_dim, dtype=jnp.float32):
    """Deterministic synthetic parameters, PyTorch Linear shapes [out, in]."""
    ks = jax.random.split(key, 12)
    s = 0.05

    def w(k, o, i):
        return (s * jax.random.normal(k, (o, i))).astype(dtype)

    def b(k, o):
        return (s * jax.random.normal(k, (o,))).astype(dtype)

    return {
        "actor_1.w": w(ks[0], hidden_dim, input_dim),
        "actor_1.b": b(ks[1], hidden_dim),
        "actor_2.w": w(ks[2], hidden_dim, input_dim + hidden_dim),
        "actor_2.b": b(ks[3], hidden_dim),
        "actor_out.w": w(ks[4], output_dim, hidden_dim),
        "actor_out.b": b(ks[5], output_dim),
        "critic_1.w": w(ks[6], hidden_dim, input_dim),
        "critic_1.b": b(ks[7], hidden_dim),
        "critic_2.w": w(ks[8], hidden_dim, input_dim + hidden_dim),
        "critic_2.b": b(ks[9], hidden_dim),
        "critic_out.w": w(ks[10], 1, hidden_dim),
        "critic_out.b": b(ks[11], 1),
    }


def prepare_params(params, compute_dtype=jnp.bfloat16):
    """One-time layout prep: transpose, fuse actor/critic, pad H so 2*HP is a
    multiple of 128, fuse the two x-driven weights, pad output to 128 lanes,
    and cast matmul operands to `compute_dtype` (biases stay f32).

    Returns (prepared_dict, output_dim). Call once; reuse across forward calls.
    """
    f32 = jnp.float32
    h, d = params["actor_1.w"].shape               # [H, D]
    o = params["actor_out.w"].shape[0]              # O
    hp = ((max(h, 1) + 63) // 64) * 64               # per-head padded hidden
    hp = max(hp, 64)                                  # 2*hp is a multiple of 128
    op = ((o + 1 + 127) // 128) * 128                 # lane-dense output width

    # ---- layer 1 (padded, fused actor|critic): [D, 2HP] --------------------
    w1 = jnp.zeros((d, 2 * hp), dtype=f32)
    w1 = w1.at[:, :h].set(params["actor_1.w"].T.astype(f32))
    w1 = w1.at[:, hp:hp + h].set(params["critic_1.w"].T.astype(f32))
    b1 = jnp.zeros((1, 2 * hp), dtype=f32)
    b1 = b1.at[0, :h].set(params["actor_1.b"].astype(f32))
    b1 = b1.at[0, hp:hp + h].set(params["critic_1.b"].astype(f32))

    # ---- layer 2: split concat([h, x]) weight into hidden / input halves ---
    wa2 = params["actor_2.w"].T.astype(f32)          # [H+D, H]
    wc2 = params["critic_2.w"].T.astype(f32)
    wa2h, wa2x = wa2[:h], wa2[h:]                    # [H, H], [D, H]
    wc2h, wc2x = wc2[:h], wc2[h:]

    w2h = jnp.zeros((2 * hp, 2 * hp), dtype=f32)     # block-diagonal, padded
    w2h = w2h.at[:h, :h].set(wa2h)
    w2h = w2h.at[hp:hp + h, hp:hp + h].set(wc2h)

    w2x = jnp.zeros((d, 2 * hp), dtype=f32)
    w2x = w2x.at[:, :h].set(wa2x)
    w2x = w2x.at[:, hp:hp + h].set(wc2x)

    b2 = jnp.zeros((1, 2 * hp), dtype=f32)
    b2 = b2.at[0, :h].set(params["actor_2.b"].astype(f32))
    b2 = b2.at[0, hp:hp + h].set(params["critic_2.b"].astype(f32))

    # ---- fuse both x-driven matmuls into one [D, 4HP] weight ---------------
    w1x = jnp.concatenate([w1, w2x], axis=1)         # [D, 4HP]

    # ---- fused output head: block-diagonal [2HP, OP], zero-padded ----------
    wo = jnp.zeros((2 * hp, op), dtype=f32)
    wo = wo.at[:h, :o].set(params["actor_out.w"].T.astype(f32))
    wo = wo.at[hp:hp + h, o:o + 1].set(params["critic_out.w"].T.astype(f32))
    bo = jnp.zeros((1, op), dtype=f32)
    bo = bo.at[0, :o].set(params["actor_out.b"].astype(f32))
    bo = bo.at[0, o:o + 1].set(params["critic_out.b"].astype(f32))

    prepared = {
        "w1x": w1x.astype(compute_dtype),            # MXU operands -> bf16
        "w2h": w2h.astype(compute_dtype),
        "wo": wo.astype(compute_dtype),
        "b1": b1, "b2": b2, "bo": bo,                # biases stay f32
    }
    return prepared, o


# --------------------------------------------------------------------------
# Row-tile selection
# --------------------------------------------------------------------------
def _pick_row_tile(n, max_tile=1024):
    """Largest row tile (multiple of 8, divides n, <= max_tile), preferring an
    even grid length so both v7x TensorCores get work; on v5e/v6e an even grid
    only costs one extra (cheap) step over the ~few-us kernel."""
    if n < 8 or n % 8 != 0:
        return n                        # tiny/ragged batch: single full block
    start = min(n, max_tile)
    start -= start % 8
    best = None
    for cand in range(start, 7, -8):
        if n % cand == 0:
            if best is None:
                best = cand
            if (n // cand) % 2 == 0:
                return cand
    return best if best is not None else n


# --------------------------------------------------------------------------
# Forward wrapper
# --------------------------------------------------------------------------
@functools.partial(jax.jit, static_argnames=("output_dim", "tm", "out_dtype"))
def a2c_lstm_forward(x, prepared, output_dim, tm=None, out_dtype=jnp.float32):
    """Fused Pallas forward. Returns (actor_out [N, O], critic_out [N, 1])."""
    n, d = x.shape
    h2 = prepared["b1"].shape[1]        # 2*HP (multiple of 128)
    w1x_cols = prepared["w1x"].shape[1]  # 4*HP
    op = prepared["wo"].shape[1]        # padded output width (multiple of 128)
    w_dtype = prepared["w1x"].dtype

    if tm is None:
        tm = _pick_row_tile(n)
    tm = min(tm, n)
    assert n % tm == 0, "batch must be a multiple of the row tile"

    # bf16 operands hit the MXU fast path on v6e/v7x and halve x DMA bytes.
    x = x.astype(w_dtype)

    # Constant-index resident blocks: single-buffered (no wasted VMEM / DMA).
    resident = lambda shape: pl.BlockSpec(shape, lambda i: (0, 0),
                                          pipeline_mode=pl.Buffered(1))
    row = lambda cols: pl.BlockSpec((tm, cols), lambda i: (i, 0))

    grid = (n // tm,)

    # Advisory cost hint so XLA overlaps neighbors around the custom call.
    flops = 2 * n * (d * w1x_cols + h2 * h2 + h2 * op)
    bytes_accessed = (
        n * d * x.dtype.itemsize
        + n * op * jnp.dtype(out_dtype).itemsize
        + sum(v.size * v.dtype.itemsize for v in prepared.values())
    )

    out = pl.pallas_call(
        _a2c_fused_kernel,
        out_shape=jax.ShapeDtypeStruct((n, op), out_dtype),
        grid_spec=pltpu.PrefetchScalarGridSpec(
            num_scalar_prefetch=0,
            grid=grid,
            in_specs=[
                row(d),                        # x
                resident((d, w1x_cols)),       # W1x = [W1 | W2x]
                resident((1, h2)),             # b1
                resident((h2, h2)),            # W2h (block-diag)
                resident((1, h2)),             # b2
                resident((h2, op)),            # Wout (block-diag, padded)
                resident((1, op)),             # bout
            ],
            out_specs=row(op),
        ),
        compiler_params=pltpu.CompilerParams(
            dimension_semantics=("parallel",),
        ),
        cost_estimate=pl.CostEstimate(
            flops=flops, transcendentals=0, bytes_accessed=bytes_accessed),
    )(
        x,
        prepared["w1x"], prepared["b1"],
        prepared["w2h"], prepared["b2"],
        prepared["wo"], prepared["bo"],
    )

    actor_out = out[:, :output_dim]
    critic_out = out[:, output_dim:output_dim + 1]
    return actor_out, critic_out


# --------------------------------------------------------------------------
# Plain-JAX reference (mirrors the PyTorch forward exactly, with concat)
# --------------------------------------------------------------------------
def a2c_lstm_ref(x, params):
    def lin(name, v):
        return v @ params[f"{name}.w"].T + params[f"{name}.b"]

    ah = jax.nn.relu(lin("actor_1", x))
    ah = jnp.concatenate([ah, x], axis=-1)
    ah = jax.nn.relu(lin("actor_2", ah))
    actor_out = lin("actor_out", ah)

    ch = jax.nn.relu(lin("critic_1", x))
    ch = jnp.concatenate([ch, x], axis=-1)
    ch = jax.nn.relu(lin("critic_2", ch))
    critic_out = lin("critic_out", ch)
    return actor_out, critic_out


if __name__ == "__main__":
    # Small shapes consistent with the module: [N, input_dim] inputs.
    INPUT_DIM, HIDDEN_DIM, OUTPUT_DIM = 64, 32, 16
    N = 256   # auto-picked row tile -> tm=128, grid=(2,) (both v7x TCs busy)

    key = jax.random.PRNGKey(0)
    kx, kp = jax.random.split(key)
    x = jax.random.normal(kx, (N, INPUT_DIM), dtype=jnp.float32)
    params = init_params(kp, INPUT_DIM, HIDDEN_DIM, OUTPUT_DIM)

    # One-time layout preparation (hoisted out of the per-call path).
    prepared, out_dim = prepare_params(params, compute_dtype=jnp.bfloat16)
    prepared = jax.device_put(prepared)

    actor_out, critic_out = a2c_lstm_forward(x, prepared, out_dim)
    jax.block_until_ready((actor_out, critic_out))

    ref_actor, ref_critic = a2c_lstm_ref(x, params)
    assert actor_out.shape == (N, OUTPUT_DIM)
    assert critic_out.shape == (N, 1)
    # bf16 MXU operands (f32 accumulation) -> loosened tolerance vs f32 ref.
    assert jnp.allclose(actor_out, ref_actor, atol=2e-2, rtol=2e-2), \
        float(jnp.max(jnp.abs(actor_out - ref_actor)))
    assert jnp.allclose(critic_out, ref_critic, atol=2e-2, rtol=2e-2), \
        float(jnp.max(jnp.abs(critic_out - ref_critic)))

    # `states` is passed through untouched in the module; nothing to compute.
    states = None
    result = (actor_out, critic_out, states)
    print("KERNEL_OK")
</pallas_src>

<mosaic_0001>
module attributes {stable_mosaic.version = 11 : i64} {
  func.func @_a2c_fused_kernel(%arg0: i32, %arg1: memref<128x64xbf16, #tpu.memory_space<vmem>>, %arg2: memref<64x256xbf16, #tpu.memory_space<vmem>>, %arg3: memref<1x128xf32, #tpu.memory_space<vmem>>, %arg4: memref<128x128xbf16, #tpu.memory_space<vmem>>, %arg5: memref<1x128xf32, #tpu.memory_space<vmem>>, %arg6: memref<128x128xbf16, #tpu.memory_space<vmem>>, %arg7: memref<1x128xf32, #tpu.memory_space<vmem>>, %arg8: memref<128x128xf32, #tpu.memory_space<vmem>>) attributes {dimension_semantics = [#tpu.dimension_semantics<parallel>], iteration_bounds = array<i64: 2>, scalar_prefetch = 0 : i64, scratch_operands = 0 : i64, tpu.core_type = #tpu.core_type<tc>, window_params = [{transform_indices = @transform_0, window_bounds = array<i64: 128, 64>}, {pipeline_mode = #tpu.pipeline_mode<synchronous>, transform_indices = @transform_1, window_bounds = array<i64: 64, 256>}, {pipeline_mode = #tpu.pipeline_mode<synchronous>, transform_indices = @transform_2, window_bounds = array<i64: 1, 128>}, {pipeline_mode = #tpu.pipeline_mode<synchronous>, transform_indices = @transform_3, window_bounds = array<i64: 128, 128>}, {pipeline_mode = #tpu.pipeline_mode<synchronous>, transform_indices = @transform_4, window_bounds = array<i64: 1, 128>}, {pipeline_mode = #tpu.pipeline_mode<synchronous>, transform_indices = @transform_5, window_bounds = array<i64: 128, 128>}, {pipeline_mode = #tpu.pipeline_mode<synchronous>, transform_indices = @transform_6, window_bounds = array<i64: 1, 128>}, {transform_indices = @transform_7, window_bounds = array<i64: 128, 128>}]} {
    %c0 = arith.constant 0 : index
    %c0_0 = arith.constant 0 : index
    %0 = vector.load %arg1[%c0, %c0_0] : memref<128x64xbf16, #tpu.memory_space<vmem>>, vector<128x64xbf16>
    %c0_1 = arith.constant 0 : index
    %c0_2 = arith.constant 0 : index
    %1 = vector.load %arg2[%c0_1, %c0_2] : memref<64x256xbf16, #tpu.memory_space<vmem>>, vector<64x256xbf16>
    %cst = arith.constant dense<0.000000e+00> : vector<128x256xf32>
    %2 = tpu.matmul %0, %1, %cst {dimension_numbers = #tpu.dot_dimension_numbers<[1], [0], [0], [1], [0, 0, 1, 1], [], []>} : vector<128x64xbf16>, vector<64x256xbf16>, vector<128x256xf32> -> vector<128x256xf32>
    %3 = vector.extract_strided_slice %2 {offsets = [0, 0], sizes = [128, 128], strides = [1, 1]} : vector<128x256xf32> to vector<128x128xf32>
    %c0_3 = arith.constant 0 : index
    %c0_4 = arith.constant 0 : index
    %4 = vector.load %arg3[%c0_3, %c0_4] : memref<1x128xf32, #tpu.memory_space<vmem>>, vector<1x128xf32>
    %5 = vector.broadcast %4 : vector<1x128xf32> to vector<128x128xf32>
    %6 = arith.addf %3, %5 : vector<128x128xf32>
    %cst_5 = arith.constant 0.000000e+00 : f32
    %7 = vector.broadcast %cst_5 : f32 to vector<128x128xf32>
    %8 = arith.maximumf %6, %7 : vector<128x128xf32>
    %9 = arith.truncf %8 : vector<128x128xf32> to vector<128x128xbf16>
    %c0_6 = arith.constant 0 : index
    %c0_7 = arith.constant 0 : index
    %10 = vector.load %arg4[%c0_6, %c0_7] : memref<128x128xbf16, #tpu.memory_space<vmem>>, vector<128x128xbf16>
    %cst_8 = arith.constant dense<0.000000e+00> : vector<128x128xf32>
    %11 = tpu.matmul %9, %10, %cst_8 {dimension_numbers = #tpu.dot_dimension_numbers<[1], [0], [0], [1], [0, 0, 1, 1], [], []>} : vector<128x128xbf16>, vector<128x128xbf16>, vector<128x128xf32> -> vector<128x128xf32>
    %12 = vector.extract_strided_slice %2 {offsets = [0, 128], sizes = [128, 128], strides = [1, 1]} : vector<128x256xf32> to vector<128x128xf32>
    %13 = arith.addf %11, %12 : vector<128x128xf32>
    %c0_9 = arith.constant 0 : index
    %c0_10 = arith.constant 0 : index
    %14 = vector.load %arg5[%c0_9, %c0_10] : memref<1x128xf32, #tpu.memory_space<vmem>>, vector<1x128xf32>
    %15 = vector.broadcast %14 : vector<1x128xf32> to vector<128x128xf32>
    %16 = arith.addf %13, %15 : vector<128x128xf32>
    %cst_11 = arith.constant 0.000000e+00 : f32
    %17 = vector.broadcast %cst_11 : f32 to vector<128x128xf32>
    %18 = arith.maximumf %16, %17 : vector<128x128xf32>
    %19 = arith.truncf %18 : vector<128x128xf32> to vector<128x128xbf16>
    %c0_12 = arith.constant 0 : index
    %c0_13 = arith.constant 0 : index
    %20 = vector.load %arg6[%c0_12, %c0_13] : memref<128x128xbf16, #tpu.memory_space<vmem>>, vector<128x128xbf16>
    %cst_14 = arith.constant dense<0.000000e+00> : vector<128x128xf32>
    %21 = tpu.matmul %19, %20, %cst_14 {dimension_numbers = #tpu.dot_dimension_numbers<[1], [0], [0], [1], [0, 0, 1, 1], [], []>} : vector<128x128xbf16>, vector<128x128xbf16>, vector<128x128xf32> -> vector<128x128xf32>
    %c0_15 = arith.constant 0 : index
    %c0_16 = arith.constant 0 : index
    %22 = vector.load %arg7[%c0_15, %c0_16] : memref<1x128xf32, #tpu.memory_space<vmem>>, vector<1x128xf32>
    %23 = vector.broadcast %22 : vector<1x128xf32> to vector<128x128xf32>
    %24 = arith.addf %21, %23 : vector<128x128xf32>
    %c0_17 = arith.constant 0 : index
    %c0_18 = arith.constant 0 : index
    %25 = vector.load %arg8[%c0_17, %c0_18] : memref<128x128xf32, #tpu.memory_space<vmem>>, vector<128x128xf32>
    tpu.vector_store %arg8[%c0_17, %c0_18], %24 {strides = array<i32>} : memref<128x128xf32, #tpu.memory_space<vmem>>, vector<128x128xf32>,
    return
  }
  func.func @transform_0(%arg0: i32) -> (i32, i32) {
    %c0_i32 = arith.constant 0 : i32
    %c0_i32_0 = arith.constant 0 : i32
    return %arg0, %c0_i32 : i32, i32
  }
  func.func @transform_1(%arg0: i32) -> (i32, i32) {
    %c0_i32 = arith.constant 0 : i32
    %c0_i32_0 = arith.constant 0 : i32
    %c0_i32_1 = arith.constant 0 : i32
    return %c0_i32, %c0_i32_0 : i32, i32
  }
  func.func @transform_2(%arg0: i32) -> (i32, i32) {
    %c0_i32 = arith.constant 0 : i32
    %c0_i32_0 = arith.constant 0 : i32
    %c0_i32_1 = arith.constant 0 : i32
    return %c0_i32, %c0_i32_0 : i32, i32
  }
  func.func @transform_3(%arg0: i32) -> (i32, i32) {
    %c0_i32 = arith.constant 0 : i32
    %c0_i32_0 = arith.constant 0 : i32
    %c0_i32_1 = arith.constant 0 : i32
    return %c0_i32, %c0_i32_0 : i32, i32
  }
  func.func @transform_4(%arg0: i32) -> (i32, i32) {
    %c0_i32 = arith.constant 0 : i32
    %c0_i32_0 = arith.constant 0 : i32
    %c0_i32_1 = arith.constant 0 : i32
    return %c0_i32, %c0_i32_0 : i32, i32
  }
  func.func @transform_5(%arg0: i32) -> (i32, i32) {
    %c0_i32 = arith.constant 0 : i32
    %c0_i32_0 = arith.constant 0 : i32
    %c0_i32_1 = arith.constant 0 : i32
    return %c0_i32, %c0_i32_0 : i32, i32
  }
  func.func @transform_6(%arg0: i32) -> (i32, i32) {
    %c0_i32 = arith.constant 0 : i32
    %c0_i32_0 = arith.constant 0 : i32
    %c0_i32_1 = arith.constant 0 : i32
    return %c0_i32, %c0_i32_0 : i32, i32
  }
  func.func @transform_7(%arg0: i32) -> (i32, i32) {
    %c0_i32 = arith.constant 0 : i32
    %c0_i32_0 = arith.constant 0 : i32
    return %arg0, %c0_i32 : i32, i32
  }
}

</mosaic_0001>

<llo_original>
// kernel: a2c_lstm_forward.1
$region0: #{a2c_lstm_forward.1}
  #allocation0 [shape = 'u32[]', space=smem, size = 0x4, offset = 0x4, fixed_abs, tag = 'smem constant byte address 0x4 - core index']
  #allocation1 [shape = 'u32[144,128]{1,0:T(1,128)}', space=vmem, size = 0x12000, scoped, tag = 'internal scratch']
  %s0 = inlined_call_operand.vmem [shape: bf16[256,64], index: 0, kind: input, shape index: {}]
  %s1 = inlined_call_operand.vmem [shape: bf16[64,256], index: 1, kind: input, shape index: {}]
  %s2 = inlined_call_operand.vmem [shape: f32[1,128], index: 2, kind: input, shape index: {}]
  %s3 = inlined_call_operand.vmem [shape: bf16[128,128], index: 3, kind: input, shape index: {}]
  %s4 = inlined_call_operand.vmem [shape: f32[1,128], index: 4, kind: input, shape index: {}]
  %s5 = inlined_call_operand.vmem [shape: bf16[128,128], index: 5, kind: input, shape index: {}]
  %s6 = inlined_call_operand.vmem [shape: f32[1,128], index: 6, kind: input, shape index: {}]
  %s7 = inlined_call_operand.vmem [shape: f32[256,128], index: 7, kind: output, shape index: {}]
  %s8 = sld [smem:[#allocation0]]
  $region61: #{a2c_lstm_forward.1} parent=0
    _
  %s10 = ssub.s32 1, %s8
  %s11 = scalar_select 0, %s10, %s8
  loop: start=0, step=1, limit=4
  $region2: #{a2c_lstm_forward.1} parent=0 // loop_pre_header
    _
  $region3: #{a2c_lstm_forward.1} parent=0 // loop_header
    %s13 = sphi 0, %s17
    %p14 = scmp.ge.s32.totalorder %s13, 4
    %s23 = sphi 0, %s25
    %s26 = sphi 0, %s23
    %s27 = sphi 0, %s26
    %s43 = sphi 0, %s27
    %s47 = sphi 0, %s47
    %s49 = sphi 0, %s47
    %s50 = sphi 0, %s49
    %s64 = sphi 0, %s50
    %s68 = sphi 0, %s68
    %s70 = sphi 0, %s68
    %s71 = sphi 0, %s70
    %s85 = sphi 0, %s71
    %s89 = sphi 0, %s89
    %s91 = sphi 0, %s89
    %s92 = sphi 0, %s91
    %s106 = sphi 0, %s92
    %s110 = sphi 0, %s110
    %s112 = sphi 0, %s110
    %s113 = sphi 0, %s112
    %s127 = sphi 0, %s113
    %s131 = sphi 0, %s131
    %s133 = sphi 0, %s131
    %s134 = sphi 0, %s133
    %s148 = sphi 0, %s134
    %s152 = sphi 0, %s152
    %s154 = sphi 0, %s152
    %s155 = sphi 0, %s154
    %s169 = sphi 0, %s155
    %s175 = sphi 0, %s177
    %s178 = sphi 0, %s175
    %s179 = sphi 0, %s178
    %s195 = sphi 0, %s179
  $region4: #{a2c_lstm_forward.1} parent=0 // loop_header_branch
    %16 = sbr.rel (%p14) target = $region8
  $region5: #{a2c_lstm_forward.1} parent=0 // loop_body
    %s18 = ssub.s32 %s13, 1
    %s19 = ssub.s32 %s13, 2
    %s20 = sadd.s32 %s13, 1
    %s21 = ssub.s32 %s13, %s20
    %p22 = scmp.eq.s32.totalorder %s21, 0
    %s24 = sadd.s32 %s23, 1
    %s25 = scalar_select %p22, %s23, %s24
    %p28 = pneg %p22
    %p29 = scmp.eq.s32.totalorder %s13, 1
    %p30 = por %p28, %p29
    %p31 = scmp.ne.s32.totalorder %s23, %s26
    %p32 = scmp.eq.s32.totalorder %s13, 0
    %p33 = por %p31, %p32
    %p34 = scmp.ne.s32.totalorder %s23, %s26
    %p35 = scmp.eq.s32.totalorder %s18, 1
    %p36 = por %p34, %p35
    %p37 = scmp.ne.s32.totalorder %s26, %s27
    %p38 = scmp.eq.s32.totalorder %s18, 0
    %p39 = por %p37, %p38
    %p40 = scmp.ne.s32.totalorder %s26, %s27
    %p41 = scmp.eq.s32.totalorder %s19, 1
    %p42 = por %p40, %p41
    %p44 = scmp.ne.s32.totalorder %s27, %s43
    %p45 = scmp.eq.s32.totalorder %s19, 0
    %p46 = por %p44, %p45
    %s48 = sadd.s32 %s47, 1
    %p51 = scmp.eq.s32.totalorder %s13, 1
    %p52 = scmp.ne.s32.totalorder %s47, %s49
    %p53 = scmp.eq.s32.totalorder %s13, 0
    %p54 = por %p52, %p53
    %p55 = scmp.ne.s32.totalorder %s47, %s49
    %p56 = scmp.eq.s32.totalorder %s18, 1
    %p57 = por %p55, %p56
    %p58 = scmp.ne.s32.totalorder %s49, %s50
    %p59 = scmp.eq.s32.totalorder %s18, 0
    %p60 = por %p58, %p59
    %p61 = scmp.ne.s32.totalorder %s49, %s50
    %p62 = scmp.eq.s32.totalorder %s19, 1
    %p63 = por %p61, %p62
    %p65 = scmp.ne.s32.totalorder %s50, %s64
    %p66 = scmp.eq.s32.totalorder %s19, 0
    %p67 = por %p65, %p66
    %s69 = sadd.s32 %s68, 1
    %p72 = scmp.eq.s32.totalorder %s13, 1
    %p73 = scmp.ne.s32.totalorder %s68, %s70
    %p74 = scmp.eq.s32.totalorder %s13, 0
    %p75 = por %p73, %p74
    %p76 = scmp.ne.s32.totalorder %s68, %s70
    %p77 = scmp.eq.s32.totalorder %s18, 1
    %p78 = por %p76, %p77
    %p79 = scmp.ne.s32.totalorder %s70, %s71
    %p80 = scmp.eq.s32.totalorder %s18, 0
    %p81 = por %p79, %p80
    %p82 = scmp.ne.s32.totalorder %s70, %s71
    %p83 = scmp.eq.s32.totalorder %s19, 1
    %p84 = por %p82, %p83
    %p86 = scmp.ne.s32.totalorder %s71, %s85
    %p87 = scmp.eq.s32.totalorder %s19, 0
    %p88 = por %p86, %p87
    %s90 = sadd.s32 %s89, 1
    %p93 = scmp.eq.s32.totalorder %s13, 1
    %p94 = scmp.ne.s32.totalorder %s89, %s91
    %p95 = scmp.eq.s32.totalorder %s13, 0
    %p96 = por %p94, %p95
    %p97 = scmp.ne.s32.totalorder %s89, %s91
    %p98 = scmp.eq.s32.totalorder %s18, 1
    %p99 = por %p97, %p98
    %p100 = scmp.ne.s32.totalorder %s91, %s92
    %p101 = scmp.eq.s32.totalorder %s18, 0
    %p102 = por %p100, %p101
    %p103 = scmp.ne.s32.totalorder %s91, %s92
    %p104 = scmp.eq.s32.totalorder %s19, 1
    %p105 = por %p103, %p104
    %p107 = scmp.ne.s32.totalorder %s92, %s106
    %p108 = scmp.eq.s32.totalorder %s19, 0
    %p109 = por %p107, %p108
    %s111 = sadd.s32 %s110, 1
    %p114 = scmp.eq.s32.totalorder %s13, 1
    %p115 = scmp.ne.s32.totalorder %s110, %s112
    %p116 = scmp.eq.s32.totalorder %s13, 0
    %p117 = por %p115, %p116
    %p118 = scmp.ne.s32.totalorder %s110, %s112
    %p119 = scmp.eq.s32.totalorder %s18, 1
    %p120 = por %p118, %p119
    %p121 = scmp.ne.s32.totalorder %s112, %s113
    %p122 = scmp.eq.s32.totalorder %s18, 0
    %p123 = por %p121, %p122
    %p124 = scmp.ne.s32.totalorder %s112, %s113
    %p125 = scmp.eq.s32.totalorder %s19, 1
    %p126 = por %p124, %p125
    %p128 = scmp.ne.s32.totalorder %s113, %s127
    %p129 = scmp.eq.s32.totalorder %s19, 0
    %p130 = por %p128, %p129
    %s132 = sadd.s32 %s131, 1
    %p135 = scmp.eq.s32.totalorder %s13, 1
    %p136 = scmp.ne.s32.totalorder %s131, %s133
    %p137 = scmp.eq.s32.totalorder %s13, 0
    %p138 = por %p136, %p137
    %p139 = scmp.ne.s32.totalorder %s131, %s133
    %p140 = scmp.eq.s32.totalorder %s18, 1
    %p141 = por %p139, %p140
    %p142 = scmp.ne.s32.totalorder %s133, %s134
    %p143 = scmp.eq.s32.totalorder %s18, 0
    %p144 = por %p142, %p143
    %p145 = scmp.ne.s32.totalorder %s133, %s134
    %p146 = scmp.eq.s32.totalorder %s19, 1
    %p147 = por %p145, %p146
    %p149 = scmp.ne.s32.totalorder %s134, %s148
    %p150 = scmp.eq.s32.totalorder %s19, 0
    %p151 = por %p149, %p150
    %s153 = sadd.s32 %s152, 1
    %p156 = scmp.eq.s32.totalorder %s13, 1
    %p157 = scmp.ne.s32.totalorder %s152, %s154
    %p158 = scmp.eq.s32.totalorder %s13, 0
    %p159 = por %p157, %p158
    %p160 = scmp.ne.s32.totalorder %s152, %s154
    %p161 = scmp.eq.s32.totalorder %s18, 1
    %p162 = por %p160, %p161
    %p163 = scmp.ne.s32.totalorder %s154, %s155
    %p164 = scmp.eq.s32.totalorder %s18, 0
    %p165 = por %p163, %p164
    %p166 = scmp.ne.s32.totalorder %s154, %s155
    %p167 = scmp.eq.s32.totalorder %s19, 1
    %p168 = por %p166, %p167
    %p170 = scmp.ne.s32.totalorder %s155, %s169
    %p171 = scmp.eq.s32.totalorder %s19, 0
    %p172 = por %p170, %p171
    %s173 = ssub.s32 %s13, %s20
    %p174 = scmp.eq.s32.totalorder %s173, 0
    %s176 = sadd.s32 %s175, 1
    %s177 = scalar_select %p174, %s175, %s176
    %p180 = pneg %p174
    %p181 = scmp.eq.s32.totalorder %s13, 1
    %p182 = por %p180, %p181
    %p183 = scmp.ne.s32.totalorder %s175, %s178
    %p184 = scmp.eq.s32.totalorder %s13, 0
    %p185 = por %p183, %p184
    %p186 = scmp.ne.s32.totalorder %s175, %s178
    %p187 = scmp.eq.s32.totalorder %s18, 1
    %p188 = por %p186, %p187
    %p189 = scmp.ne.s32.totalorder %s178, %s179
    %p190 = scmp.eq.s32.totalorder %s18, 0
    %p191 = por %p189, %p190
    %p192 = scmp.ne.s32.totalorder %s178, %s179
    %p193 = scmp.eq.s32.totalorder %s19, 1
    %p194 = por %p192, %p193
    %p196 = scmp.ne.s32.totalorder %s179, %s195
    %p197 = scmp.eq.s32.totalorder %s19, 0
    %p198 = por %p196, %p197
    %p199 = scmp.le.s32.totalorder 1, %s13
    %p200 = scmp.lt.s32.totalorder %s13, 3
    %p201 = pnand %p199, %p200
    %p202 = pneg %p201
    // Predicated region
    $region9: #{a2c_lstm_forward.1} parent=5 // pred_check
      _
    $region10: #{a2c_lstm_forward.1} parent=5 // pred_check_branch
      %204 = sbr.rel (%p201) target = $region12
    $region11: #{a2c_lstm_forward.1} parent=5 // pred_region
      %s205 = ssub.s32 %s13, 1
      // Predicated region
      $region13: #{a2c_lstm_forward.1} parent=11 // pred_check
        %p206 = pneg %p60
      $region14: #{a2c_lstm_forward.1} parent=11 // pred_check_branch
        %208 = sbr.rel (%p206) target = $region16
      $region15: #{a2c_lstm_forward.1} parent=11 // pred_region
        _
      $region16: #{a2c_lstm_forward.1} parent=11 // pred_fallthru
        _
      // Predicated region
      $region17: #{a2c_lstm_forward.1} parent=11 // pred_check
        %p209 = pneg %p81
      $region18: #{a2c_lstm_forward.1} parent=11 // pred_check_branch
        %211 = sbr.rel (%p209) target = $region20
      $region19: #{a2c_lstm_forward.1} parent=11 // pred_region
        _
      $region20: #{a2c_lstm_forward.1} parent=11 // pred_fallthru
        _
      // Predicated region
      $region21: #{a2c_lstm_forward.1} parent=11 // pred_check
        %p212 = pneg %p102
      $region22: #{a2c_lstm_forward.1} parent=11 // pred_check_branch
        %214 = sbr.rel (%p212) target = $region24
      $region23: #{a2c_lstm_forward.1} parent=11 // pred_region
        _
      $region24: #{a2c_lstm_forward.1} parent=11 // pred_fallthru
        _
      // Predicated region
      $region25: #{a2c_lstm_forward.1} parent=11 // pred_check
        %p215 = pneg %p123
      $region26: #{a2c_lstm_forward.1} parent=11 // pred_check_branch
        %217 = sbr.rel (%p215) target = $region28
      $region27: #{a2c_lstm_forward.1} parent=11 // pred_region
        _
      $region28: #{a2c_lstm_forward.1} parent=11 // pred_fallthru
        _
      // Predicated region
      $region29: #{a2c_lstm_forward.1} parent=11 // pred_check
        %p218 = pneg %p144
      $region30: #{a2c_lstm_forward.1} parent=11 // pred_check_branch
        %220 = sbr.rel (%p218) target = $region32
      $region31: #{a2c_lstm_forward.1} parent=11 // pred_region
        _
      $region32: #{a2c_lstm_forward.1} parent=11 // pred_fallthru
        _
      // Predicated region
      $region33: #{a2c_lstm_forward.1} parent=11 // pred_check
        %p221 = pneg %p165
      $region34: #{a2c_lstm_forward.1} parent=11 // pred_check_branch
        %223 = sbr.rel (%p221) target = $region36
      $region35: #{a2c_lstm_forward.1} parent=11 // pred_region
        _
      $region36: #{a2c_lstm_forward.1} parent=11 // pred_fallthru
        _
    $region12: #{a2c_lstm_forward.1} parent=5 // pred_fallthru
      _
    %p224 = scmp.lt.s32.totalorder %s13, 2
    // Predicated region
    $region37: #{a2c_lstm_forward.1} parent=5 // pred_check
      %p225 = pneg %p224
    $region38: #{a2c_lstm_forward.1} parent=5 // pred_check_branch
      %227 = sbr.rel (%p225) target = $region40
    $region39: #{a2c_lstm_forward.1} parent=5 // pred_region
      // Predicated region
      $region41: #{a2c_lstm_forward.1} parent=39 // pred_check
        %p228 = pneg %p33
      $region42: #{a2c_lstm_forward.1} parent=39 // pred_check_branch
        %230 = sbr.rel (%p228) target = $region44
      $region43: #{a2c_lstm_forward.1} parent=39 // pred_region
        %s231 = smul.u32 16, %s13
        %p232 = scmp.lt.s32.totalorder %s231, 31
        %s233 = scalar_select %p232, %s231, 31
        %s234 = smul.addr %s233, 4
        %s235 = scalar_lea.vmem %s0, %s234
        %s236 = smul.u32 16, %s13
      $region44: #{a2c_lstm_forward.1} parent=39 // pred_fallthru
        _
    $region40: #{a2c_lstm_forward.1} parent=5 // pred_fallthru
      _
    %p237 = scmp.le.s32.totalorder 1, %s13
    %p238 = scmp.lt.s32.totalorder %s13, 3
    %p239 = pnand %p237, %p238
    %p240 = pneg %p239
    // Predicated region
    $region45: #{a2c_lstm_forward.1} parent=5 // pred_check
      _
    $region46: #{a2c_lstm_forward.1} parent=5 // pred_check_branch
      %242 = sbr.rel (%p239) target = $region48
    $region47: #{a2c_lstm_forward.1} parent=5 // pred_region
      %s243 = ssub.s32 %s13, 1
      %s244 = smul.u32 16, %s18
      %p245 = scmp.lt.s32.totalorder %s244, 31
      %s246 = scalar_select %p245, %s244, 31
      %s247 = smul.addr %s246, 4
      %s248 = scalar_lea.vmem %s0, %s247
      %p249 = pneg %p39
      %p250 = pneg %p36
      %p251 = pneg %p60
      %p252 = pneg %p57
      %p253 = pneg %p81
      %p254 = pneg %p78
      %p255 = pneg %p102
      %p256 = pneg %p99
      %p257 = pneg %p123
      %p258 = pneg %p120
      %p259 = pneg %p144
      %p260 = pneg %p141
      %p261 = pneg %p165
      %p262 = pneg %p162
      %p263 = pneg %p191
      %p264 = pneg %p188
      %s265 = smul.u32 16, %s18
      %p266 = scmp.lt.s32.totalorder %s265, 31
      %s267 = scalar_select %p266, %s265, 31
      %s268 = smul.addr %s267, 8
      %s269 = scalar_lea.vmem %s7, %s268
      %s270 = smul.u32 16, %s18
      %p271 = scmp.lt.s32.totalorder %s270, 31
      %s272 = scalar_select %p271, %s270, 31
      %s273 = smul.addr %s272, 4
      %s274 = scalar_lea.vmem %s0, %s273
      %s275 = smul.u32 16, %s18
      %s276 = smul.u32 16, %s18
      %p277 = scmp.lt.s32.totalorder %s276, 31
      %s278 = scalar_select %p277, %s276, 31
      %s279 = smul.addr %s278, 8
      %s280 = scalar_lea.vmem %s7, %s279
      %s281 = smul.u32 16, %s18
      %v283 = vld [vmem:[%s274] sm:$0xf]
      %v284 = vld [vmem:[%s274 + $0x4] sm:$0xf]
      %v285 = vld [vmem:[%s274 + $0x8] sm:$0xf]
      %v286 = vld [vmem:[%s274 + $0xc] sm:$0xf]
      %v287 = vld [vmem:[%s274 + $0x10] sm:$0xf]
      %v288 = vld [vmem:[%s274 + $0x14] sm:$0xf]
      %v289 = vld [vmem:[%s274 + $0x18] sm:$0xf]
      %v290 = vld [vmem:[%s274 + $0x1c] sm:$0xf]
      %v291 = vld [vmem:[%s274 + $0x20] sm:$0xf]
      %v292 = vld [vmem:[%s274 + $0x24] sm:$0xf]
      %v293 = vld [vmem:[%s274 + $0x28] sm:$0xf]
      %v294 = vld [vmem:[%s274 + $0x2c] sm:$0xf]
      %v295 = vld [vmem:[%s274 + $0x30] sm:$0xf]
      %v296 = vld [vmem:[%s274 + $0x34] sm:$0xf]
      %v297 = vld [vmem:[%s274 + $0x38] sm:$0xf]
      %v298 = vld [vmem:[%s274 + $0x3c] sm:$0xf]
      %v299 = vld [vmem:[%s1] sm:$0xff]
      %v300 = vld [vmem:[%s1 + $0x8] sm:$0xff]
      %v301 = vld [vmem:[%s1 + $0x10] sm:$0xff]
      %v302 = vld [vmem:[%s1 + $0x18] sm:$0xff]
      %v303 = vld [vmem:[%s1 + $0x20] sm:$0xff]
      %v304 = vld [vmem:[%s1 + $0x28] sm:$0xff]
      %v305 = vld [vmem:[%s1 + $0x30] sm:$0xff]
      %v306 = vld [vmem:[%s1 + $0x38] sm:$0xff]
      %v323 = vunpack.c.l.b16 %v283
      %v324 = vunpack.c.l.b16 %v284
      %v325 = vunpack.c.l.b16 %v285
      %v326 = vunpack.c.l.b16 %v286
      %v327 = vunpack.c.l.b16 %v287
      %v328 = vunpack.c.l.b16 %v288
      %v329 = vunpack.c.l.b16 %v289
      %v330 = vunpack.c.l.b16 %v290
      %v331 = vunpack.c.l.b16 %v291
      %v332 = vunpack.c.l.b16 %v292
      %v333 = vunpack.c.l.b16 %v293
      %v334 = vunpack.c.l.b16 %v294
      %v335 = vunpack.c.l.b16 %v295
      %v336 = vunpack.c.l.b16 %v296
      %v337 = vunpack.c.l.b16 %v297
      %v338 = vunpack.c.l.b16 %v298
      %v339 = vpack.c.b16 %v324, %v323
      %v340 = vpack.c.b16 %v326, %v325
      %v341 = vpack.c.b16 %v328, %v327
      %v342 = vpack.c.b16 %v330, %v329
      %v343 = vpack.c.b16 %v332, %v331
      %v344 = vpack.c.b16 %v334, %v333
      %v345 = vpack.c.b16 %v336, %v335
      %v346 = vpack.c.b16 %v338, %v337
      %v355 = vunpack.c.l.b16 %v299
      %v356 = vunpack.c.h.b16 %v299
      %v357 = vunpack.c.l.b16 %v300
      %v358 = vunpack.c.h.b16 %v300
      %v359 = vunpack.c.l.b16 %v301
      %v360 = vunpack.c.h.b16 %v301
      %v361 = vunpack.c.l.b16 %v302
      %v362 = vunpack.c.h.b16 %v302
      %v363 = vunpack.c.l.b16 %v303
      %v364 = vunpack.c.h.b16 %v303
      %v365 = vunpack.c.l.b16 %v304
      %v366 = vunpack.c.h.b16 %v304
      %v367 = vunpack.c.l.b16 %v305
      %v368 = vunpack.c.h.b16 %v305
      %v369 = vunpack.c.l.b16 %v306
      %v370 = vunpack.c.h.b16 %v306
      %v371 = vpack.c.b16 %v357, %v355
      %v372 = vpack.c.b16 %v358, %v356
      %v373 = vpack.c.b16 %v361, %v359
      %v374 = vpack.c.b16 %v362, %v360
      %v375 = vpack.c.b16 %v365, %v363
      %v376 = vpack.c.b16 %v366, %v364
      %v377 = vpack.c.b16 %v369, %v367
      %v378 = vpack.c.b16 %v370, %v368
      %vm387 = vcmask 523264
      %v389 = vsel %vm387, %v339, 0
      %v392 = vsel %vm387, %v340, 0
      %v395 = vsel %vm387, %v341, 0
      %v398 = vsel %vm387, %v342, 0
      %v401 = vsel %vm387, %v343, 0
      %v404 = vsel %vm387, %v344, 0
      %v407 = vsel %vm387, %v345, 0
      %v410 = vsel %vm387, %v346, 0
      %412 = vmatprep.subr.bf16.mxu0 0
      %413 = vmatpush1.bf16.msra.mxu0 0
      %414 = vmatprep.subr.bf16.mxu0 0
      %415 = vmatpush1.bf16.msra.mxu0 0
      %416 = vmatprep.subr.bf16.mxu0 0
      %417 = vmatpush1.bf16.msra.mxu0 0
      %418 = vmatprep.subr.bf16.mxu0 0
      %419 = vmatpush1.bf16.msra.mxu0 0
      %420 = vmatprep.subr.bf16.mxu0 %v378
      %421 = vmatpush1.bf16.msra.mxu0 %v377
      %422 = vmatprep.subr.bf16.mxu0 %v376
      %423 = vmatpush1.bf16.msra.mxu0 %v375
      %424 = vmatprep.subr.bf16.mxu0 %v374
      %425 = vmatpush1.bf16.msra.mxu0 %v373
      %426 = vmatprep.subr.bf16.mxu0 %v372
      %427 = vmatpush1.bf16.msra.mxu0 %v371
      %428 = vmatprep.subr.bf16.mxu0 0
      %429 = vmatpush2.bf16.msra.mxu0 0
      %430 = vmatprep.subr.bf16.mxu0 0
      %431 = vmatpush2.bf16.msra.mxu0 0
      %432 = vmatprep.subr.bf16.mxu0 0
      %433 = vmatpush2.bf16.msra.mxu0 0
      %434 = vmatprep.subr.bf16.mxu0 0
      %435 = vmatpush2.bf16.msra.mxu0 0
      %436 = vmatprep.subr.bf16.mxu0 0
      %437 = vmatpush2.bf16.msra.mxu0 0
      %438 = vmatprep.subr.bf16.mxu0 0
      %439 = vmatpush2.bf16.msra.mxu0 0
      %440 = vmatprep.subr.bf16.mxu0 0
      %441 = vmatpush2.bf16.msra.mxu0 0
      %442 = vmatprep.subr.bf16.mxu0 0
      %443 = vmatpush2.bf16.msra.mxu0 0
      %444 = vmatprep.mubr.bf16.mxu0 0
      %445 = vmatmul.mubr.bf16.gmra.mxu0 %v389
      %v446 = vpop.f32.mrf.mxu0
      %v447 = vadd.f32 0.0, %v446
      %v448 = vpop.f32.mrf.mxu0
      %v449 = vadd.f32 0.0, %v448
      %v450 = vpop.f32.mrf.mxu0
      %v451 = vadd.f32 0.0, %v450
      %v452 = vpop.f32.mrf.mxu0
      %v453 = vadd.f32 0.0, %v452
      %454 = vmatprep.mubr.bf16.mxu0 0
      %455 = vmatmul.mubr.bf16.gmra.mxu0 %v392
      %v456 = vpop.f32.mrf.mxu0
      %v457 = vadd.f32 0.0, %v456
      %v458 = vpop.f32.mrf.mxu0
      %v459 = vadd.f32 0.0, %v458
      %v460 = vpop.f32.mrf.mxu0
      %v461 = vadd.f32 0.0, %v460
      %v462 = vpop.f32.mrf.mxu0
      %v463 = vadd.f32 0.0, %v462
      %464 = vmatprep.mubr.bf16.mxu0 0
      %465 = vmatmul.mubr.bf16.gmra.mxu0 %v395
      %v466 = vpop.f32.mrf.mxu0
      %v467 = vadd.f32 0.0, %v466
      %v468 = vpop.f32.mrf.mxu0
      %v469 = vadd.f32 0.0, %v468
      %v470 = vpop.f32.mrf.mxu0
      %v471 = vadd.f32 0.0, %v470
      %v472 = vpop.f32.mrf.mxu0
      %v473 = vadd.f32 0.0, %v472
      %474 = vmatprep.mubr.bf16.mxu0 0
      %475 = vmatmul.mubr.bf16.gmra.mxu0 %v398
      %v476 = vpop.f32.mrf.mxu0
      %v477 = vadd.f32 0.0, %v476
      %v478 = vpop.f32.mrf.mxu0
      %v479 = vadd.f32 0.0, %v478
      %v480 = vpop.f32.mrf.mxu0
      %v481 = vadd.f32 0.0, %v480
      %v482 = vpop.f32.mrf.mxu0
      %v483 = vadd.f32 0.0, %v482
      %484 = vmatprep.mubr.bf16.mxu0 0
      %485 = vmatmul.mubr.bf16.gmra.mxu0 %v401
      %v486 = vpop.f32.mrf.mxu0
      %v487 = vadd.f32 0.0, %v486
      %v488 = vpop.f32.mrf.mxu0
      %v489 = vadd.f32 0.0, %v488
      %v490 = vpop.f32.mrf.mxu0
      %v491 = vadd.f32 0.0, %v490
      %v492 = vpop.f32.mrf.mxu0
      %v493 = vadd.f32 0.0, %v492
      %494 = vmatprep.mubr.bf16.mxu0 0
      %495 = vmatmul.mubr.bf16.gmra.mxu0 %v404
      %v496 = vpop.f32.mrf.mxu0
      %v497 = vadd.f32 0.0, %v496
      %v498 = vpop.f32.mrf.mxu0
      %v499 = vadd.f32 0.0, %v498
      %v500 = vpop.f32.mrf.mxu0
      %v501 = vadd.f32 0.0, %v500
      %v502 = vpop.f32.mrf.mxu0
      %v503 = vadd.f32 0.0, %v502
      %504 = vmatprep.mubr.bf16.mxu0 0
      %505 = vmatmul.mubr.bf16.gmra.mxu0 %v407
      %v506 = vpop.f32.mrf.mxu0
      %v507 = vadd.f32 0.0, %v506
      %v508 = vpop.f32.mrf.mxu0
      %v509 = vadd.f32 0.0, %v508
      %v510 = vpop.f32.mrf.mxu0
      %v511 = vadd.f32 0.0, %v510
      %v512 = vpop.f32.mrf.mxu0
      %v513 = vadd.f32 0.0, %v512
      %514 = vmatprep.mubr.bf16.mxu0 0
      %515 = vmatmul.mubr.bf16.gmra.mxu0 %v410
      %v516 = vpop.f32.mrf.mxu0
      %v517 = vadd.f32 0.0, %v516
      %v518 = vpop.f32.mrf.mxu0
      %v519 = vadd.f32 0.0, %v518
      %v520 = vpop.f32.mrf.mxu0
      %v521 = vadd.f32 0.0, %v520
      %v522 = vpop.f32.mrf.mxu0
      %v523 = vadd.f32 0.0, %v522
      %524 = vdwg.mxu0
      %v525 = vld [vmem:[%s2] sm:$0x1]
      %v527 = vlaneseq
      %v528 = vshrl.u32 %v527, 7
      %v529 = vsub.s32 0, %v528
      %v530 = vrot.slane %v525, %v529
      %v532 = vadd.f32 %v447, %v530
      %v533 = vadd.f32 %v451, %v530
      %v534 = vadd.f32 %v457, %v530
      %v535 = vadd.f32 %v461, %v530
      %v536 = vadd.f32 %v467, %v530
      %v537 = vadd.f32 %v471, %v530
      %v538 = vadd.f32 %v477, %v530
      %v539 = vadd.f32 %v481, %v530
      %v540 = vadd.f32 %v487, %v530
      %v541 = vadd.f32 %v491, %v530
      %v542 = vadd.f32 %v497, %v530
      %v543 = vadd.f32 %v501, %v530
      %v544 = vadd.f32 %v507, %v530
      %v545 = vadd.f32 %v511, %v530
      %v546 = vadd.f32 %v517, %v530
      %v547 = vadd.f32 %v521, %v530
      %v548 = vmax.f32 %v532, 0.0
      %v549 = vmax.f32 %v533, 0.0
      %v550 = vmax.f32 %v534, 0.0
      %v551 = vmax.f32 %v535, 0.0
      %v552 = vmax.f32 %v536, 0.0
      %v553 = vmax.f32 %v537, 0.0
      %v554 = vmax.f32 %v538, 0.0
      %v555 = vmax.f32 %v539, 0.0
      %v556 = vmax.f32 %v540, 0.0
      %v557 = vmax.f32 %v541, 0.0
      %v558 = vmax.f32 %v542, 0.0
      %v559 = vmax.f32 %v543, 0.0
      %v560 = vmax.f32 %v544, 0.0
      %v561 = vmax.f32 %v545, 0.0
      %v562 = vmax.f32 %v546, 0.0
      %v563 = vmax.f32 %v547, 0.0
      %v564 = vpack.c.bf16 %v549, %v548
      %v565 = vpack.c.bf16 %v551, %v550
      %v566 = vpack.c.bf16 %v553, %v552
      %v567 = vpack.c.bf16 %v555, %v554
      %v568 = vpack.c.bf16 %v557, %v556
      %v569 = vpack.c.bf16 %v559, %v558
      %v570 = vpack.c.bf16 %v561, %v560
      %v571 = vpack.c.bf16 %v563, %v562
      %v572 = vld [vmem:[%s3] sm:$0xf]
      %v573 = vld [vmem:[%s3 + $0x4] sm:$0xf]
      %v574 = vld [vmem:[%s3 + $0x8] sm:$0xf]
      %v575 = vld [vmem:[%s3 + $0xc] sm:$0xf]
      %v576 = vld [vmem:[%s3 + $0x10] sm:$0xf]
      %v577 = vld [vmem:[%s3 + $0x14] sm:$0xf]
      %v578 = vld [vmem:[%s3 + $0x18] sm:$0xf]
      %v579 = vld [vmem:[%s3 + $0x1c] sm:$0xf]
      %v580 = vld [vmem:[%s3 + $0x20] sm:$0xf]
      %v581 = vld [vmem:[%s3 + $0x24] sm:$0xf]
      %v582 = vld [vmem:[%s3 + $0x28] sm:$0xf]
      %v583 = vld [vmem:[%s3 + $0x2c] sm:$0xf]
      %v584 = vld [vmem:[%s3 + $0x30] sm:$0xf]
      %v585 = vld [vmem:[%s3 + $0x34] sm:$0xf]
      %v586 = vld [vmem:[%s3 + $0x38] sm:$0xf]
      %v587 = vld [vmem:[%s3 + $0x3c] sm:$0xf]
      %v604 = vunpack.c.l.b16 %v572
      %v605 = vunpack.c.l.b16 %v573
      %v606 = vunpack.c.l.b16 %v574
      %v607 = vunpack.c.l.b16 %v575
      %v608 = vunpack.c.l.b16 %v576
      %v609 = vunpack.c.l.b16 %v577
      %v610 = vunpack.c.l.b16 %v578
      %v611 = vunpack.c.l.b16 %v579
      %v612 = vunpack.c.l.b16 %v580
      %v613 = vunpack.c.l.b16 %v581
      %v614 = vunpack.c.l.b16 %v582
      %v615 = vunpack.c.l.b16 %v583
      %v616 = vunpack.c.l.b16 %v584
      %v617 = vunpack.c.l.b16 %v585
      %v618 = vunpack.c.l.b16 %v586
      %v619 = vunpack.c.l.b16 %v587
      %v620 = vpack.c.b16 %v605, %v604
      %v621 = vpack.c.b16 %v607, %v606
      %v622 = vpack.c.b16 %v609, %v608
      %v623 = vpack.c.b16 %v611, %v610
      %v624 = vpack.c.b16 %v613, %v612
      %v625 = vpack.c.b16 %v615, %v614
      %v626 = vpack.c.b16 %v617, %v616
      %v627 = vpack.c.b16 %v619, %v618
      %636 = vmatprep.subr.bf16.mxu0 0
      %637 = vmatpush1.bf16.msra.mxu0 %v627
      %638 = vmatprep.subr.bf16.mxu0 0
      %639 = vmatpush1.bf16.msra.mxu0 %v626
      %640 = vmatprep.subr.bf16.mxu0 0
      %641 = vmatpush1.bf16.msra.mxu0 %v625
      %642 = vmatprep.subr.bf16.mxu0 0
      %643 = vmatpush1.bf16.msra.mxu0 %v624
      %644 = vmatprep.subr.bf16.mxu0 0
      %645 = vmatpush1.bf16.msra.mxu0 %v623
      %646 = vmatprep.subr.bf16.mxu0 0
      %647 = vmatpush1.bf16.msra.mxu0 %v622
      %648 = vmatprep.subr.bf16.mxu0 0
      %649 = vmatpush1.bf16.msra.mxu0 %v621
      %650 = vmatprep.subr.bf16.mxu0 0
      %651 = vmatpush1.bf16.msra.mxu0 %v620
      %652 = vmatprep.subr.bf16.mxu0 0
      %653 = vmatpush2.bf16.msra.mxu0 0
      %654 = vmatprep.subr.bf16.mxu0 0
      %655 = vmatpush2.bf16.msra.mxu0 0
      %656 = vmatprep.subr.bf16.mxu0 0
      %657 = vmatpush2.bf16.msra.mxu0 0
      %658 = vmatprep.subr.bf16.mxu0 0
      %659 = vmatpush2.bf16.msra.mxu0 0
      %660 = vmatprep.subr.bf16.mxu0 0
      %661 = vmatpush2.bf16.msra.mxu0 0
      %662 = vmatprep.subr.bf16.mxu0 0
      %663 = vmatpush2.bf16.msra.mxu0 0
      %664 = vmatprep.subr.bf16.mxu0 0
      %665 = vmatpush2.bf16.msra.mxu0 0
      %666 = vmatprep.subr.bf16.mxu0 0
      %667 = vmatpush2.bf16.msra.mxu0 0
      %668 = vmatprep.mubr.bf16.mxu0 0
      %669 = vmatmul.mubr.bf16.gmra.mxu0 %v564
      %v670 = vpop.f32.mrf.mxu0
      %v671 = vadd.f32 %v449, %v670
      %v672 = vpop.f32.mrf.mxu0
      %v673 = vpop.f32.mrf.mxu0
      %v674 = vadd.f32 %v453, %v673
      %v675 = vpop.f32.mrf.mxu0
      %676 = vmatprep.mubr.bf16.mxu0 0
      %677 = vmatmul.mubr.bf16.gmra.mxu0 %v565
      %v678 = vpop.f32.mrf.mxu0
      %v679 = vadd.f32 %v459, %v678
      %v680 = vpop.f32.mrf.mxu0
      %v681 = vpop.f32.mrf.mxu0
      %v682 = vadd.f32 %v463, %v681
      %v683 = vpop.f32.mrf.mxu0
      %684 = vmatprep.mubr.bf16.mxu0 0
      %685 = vmatmul.mubr.bf16.gmra.mxu0 %v566
      %v686 = vpop.f32.mrf.mxu0
      %v687 = vadd.f32 %v469, %v686
      %v688 = vpop.f32.mrf.mxu0
      %v689 = vpop.f32.mrf.mxu0
      %v690 = vadd.f32 %v473, %v689
      %v691 = vpop.f32.mrf.mxu0
      %692 = vmatprep.mubr.bf16.mxu0 0
      %693 = vmatmul.mubr.bf16.gmra.mxu0 %v567
      %v694 = vpop.f32.mrf.mxu0
      %v695 = vadd.f32 %v479, %v694
      %v696 = vpop.f32.mrf.mxu0
      %v697 = vpop.f32.mrf.mxu0
      %v698 = vadd.f32 %v483, %v697
      %v699 = vpop.f32.mrf.mxu0
      %700 = vmatprep.mubr.bf16.mxu0 0
      %701 = vmatmul.mubr.bf16.gmra.mxu0 %v568
      %v702 = vpop.f32.mrf.mxu0
      %v703 = vadd.f32 %v489, %v702
      %v704 = vpop.f32.mrf.mxu0
      %v705 = vpop.f32.mrf.mxu0
      %v706 = vadd.f32 %v493, %v705
      %v707 = vpop.f32.mrf.mxu0
      %708 = vmatprep.mubr.bf16.mxu0 0
      %709 = vmatmul.mubr.bf16.gmra.mxu0 %v569
      %v710 = vpop.f32.mrf.mxu0
      %v711 = vadd.f32 %v499, %v710
      %v712 = vpop.f32.mrf.mxu0
      %v713 = vpop.f32.mrf.mxu0
      %v714 = vadd.f32 %v503, %v713
      %v715 = vpop.f32.mrf.mxu0
      %716 = vmatprep.mubr.bf16.mxu0 0
      %717 = vmatmul.mubr.bf16.gmra.mxu0 %v570
      %v718 = vpop.f32.mrf.mxu0
      %v719 = vadd.f32 %v509, %v718
      %v720 = vpop.f32.mrf.mxu0
      %v721 = vpop.f32.mrf.mxu0
      %v722 = vadd.f32 %v513, %v721
      %v723 = vpop.f32.mrf.mxu0
      %724 = vmatprep.mubr.bf16.mxu0 0
      %725 = vmatmul.mubr.bf16.gmra.mxu0 %v571
      %v726 = vpop.f32.mrf.mxu0
      %v727 = vadd.f32 %v519, %v726
      %v728 = vpop.f32.mrf.mxu0
      %v729 = vpop.f32.mrf.mxu0
      %v730 = vadd.f32 %v523, %v729
      %v731 = vpop.f32.mrf.mxu0
      %732 = vdwg.mxu0
      %v733 = vld [vmem:[%s4] sm:$0x1]
      %v735 = vlaneseq
      %v736 = vshrl.u32 %v735, 7
      %v737 = vsub.s32 0, %v736
      %v738 = vrot.slane %v733, %v737
      %v740 = vadd.f32 %v671, %v738
      %v741 = vadd.f32 %v674, %v738
      %v742 = vadd.f32 %v679, %v738
      %v743 = vadd.f32 %v682, %v738
      %v744 = vadd.f32 %v687, %v738
      %v745 = vadd.f32 %v690, %v738
      %v746 = vadd.f32 %v695, %v738
      %v747 = vadd.f32 %v698, %v738
      %v748 = vadd.f32 %v703, %v738
      %v749 = vadd.f32 %v706, %v738
      %v750 = vadd.f32 %v711, %v738
      %v751 = vadd.f32 %v714, %v738
      %v752 = vadd.f32 %v719, %v738
      %v753 = vadd.f32 %v722, %v738
      %v754 = vadd.f32 %v727, %v738
      %v755 = vadd.f32 %v730, %v738
      %v756 = vmax.f32 %v740, 0.0
      %v757 = vmax.f32 %v741, 0.0
      %v758 = vmax.f32 %v742, 0.0
      %v759 = vmax.f32 %v743, 0.0
      %v760 = vmax.f32 %v744, 0.0
      %v761 = vmax.f32 %v745, 0.0
      %v762 = vmax.f32 %v746, 0.0
      %v763 = vmax.f32 %v747, 0.0
      %v764 = vmax.f32 %v748, 0.0
      %v765 = vmax.f32 %v749, 0.0
      %v766 = vmax.f32 %v750, 0.0
      %v767 = vmax.f32 %v751, 0.0
      %v768 = vmax.f32 %v752, 0.0
      %v769 = vmax.f32 %v753, 0.0
      %v770 = vmax.f32 %v754, 0.0
      %v771 = vmax.f32 %v755, 0.0
      %v772 = vpack.c.bf16 %v757, %v756
      %v773 = vpack.c.bf16 %v759, %v758
      %v774 = vpack.c.bf16 %v761, %v760
      %v775 = vpack.c.bf16 %v763, %v762
      %v776 = vpack.c.bf16 %v765, %v764
      %v777 = vpack.c.bf16 %v767, %v766
      %v778 = vpack.c.bf16 %v769, %v768
      %v779 = vpack.c.bf16 %v771, %v770
      %v780 = vld [vmem:[%s5] sm:$0xf]
      %v781 = vld [vmem:[%s5 + $0x4] sm:$0xf]
      %v782 = vld [vmem:[%s5 + $0x8] sm:$0xf]
      %v783 = vld [vmem:[%s5 + $0xc] sm:$0xf]
      %v784 = vld [vmem:[%s5 + $0x10] sm:$0xf]
      %v785 = vld [vmem:[%s5 + $0x14] sm:$0xf]
      %v786 = vld [vmem:[%s5 + $0x18] sm:$0xf]
      %v787 = vld [vmem:[%s5 + $0x1c] sm:$0xf]
      %v788 = vld [vmem:[%s5 + $0x20] sm:$0xf]
      %v789 = vld [vmem:[%s5 + $0x24] sm:$0xf]
      %v790 = vld [vmem:[%s5 + $0x28] sm:$0xf]
      %v791 = vld [vmem:[%s5 + $0x2c] sm:$0xf]
      %v792 = vld [vmem:[%s5 + $0x30] sm:$0xf]
      %v793 = vld [vmem:[%s5 + $0x34] sm:$0xf]
      %v794 = vld [vmem:[%s5 + $0x38] sm:$0xf]
      %v795 = vld [vmem:[%s5 + $0x3c] sm:$0xf]
      %v796 = vld [vmem:[%s6] sm:$0x1]
      %v798 = vlaneseq
      %v799 = vshrl.u32 %v798, 7
      %v800 = vsub.s32 0, %v799
      %v801 = vrot.slane %v796, %v800
      %v819 = vunpack.c.l.b16 %v780
      %v820 = vunpack.c.l.b16 %v781
      %v821 = vunpack.c.l.b16 %v782
      %v822 = vunpack.c.l.b16 %v783
      %v823 = vunpack.c.l.b16 %v784
      %v824 = vunpack.c.l.b16 %v785
      %v825 = vunpack.c.l.b16 %v786
      %v826 = vunpack.c.l.b16 %v787
      %v827 = vunpack.c.l.b16 %v788
      %v828 = vunpack.c.l.b16 %v789
      %v829 = vunpack.c.l.b16 %v790
      %v830 = vunpack.c.l.b16 %v791
      %v831 = vunpack.c.l.b16 %v792
      %v832 = vunpack.c.l.b16 %v793
      %v833 = vunpack.c.l.b16 %v794
      %v834 = vunpack.c.l.b16 %v795
      %v835 = vpack.c.b16 %v820, %v819
      %v836 = vpack.c.b16 %v822, %v821
      %v837 = vpack.c.b16 %v824, %v823
      %v838 = vpack.c.b16 %v826, %v825
      %v839 = vpack.c.b16 %v828, %v827
      %v840 = vpack.c.b16 %v830, %v829
      %v841 = vpack.c.b16 %v832, %v831
      %v842 = vpack.c.b16 %v834, %v833
      %851 = vmatprep.subr.bf16.mxu0 0
      %852 = vmatpush1.bf16.msra.mxu0 %v842
      %853 = vmatprep.subr.bf16.mxu0 0
      %854 = vmatpush1.bf16.msra.mxu0 %v841
      %855 = vmatprep.subr.bf16.mxu0 0
      %856 = vmatpush1.bf16.msra.mxu0 %v840
      %857 = vmatprep.subr.bf16.mxu0 0
      %858 = vmatpush1.bf16.msra.mxu0 %v839
      %859 = vmatprep.subr.bf16.mxu0 0
      %860 = vmatpush1.bf16.msra.mxu0 %v838
      %861 = vmatprep.subr.bf16.mxu0 0
      %862 = vmatpush1.bf16.msra.mxu0 %v837
      %863 = vmatprep.subr.bf16.mxu0 0
      %864 = vmatpush1.bf16.msra.mxu0 %v836
      %865 = vmatprep.subr.bf16.mxu0 0
      %866 = vmatpush1.bf16.msra.mxu0 %v835
      %867 = vmatprep.subr.bf16.mxu0 0
      %868 = vmatpush2.bf16.msra.mxu0 0
      %869 = vmatprep.subr.bf16.mxu0 0
      %870 = vmatpush2.bf16.msra.mxu0 0
      %871 = vmatprep.subr.bf16.mxu0 0
      %872 = vmatpush2.bf16.msra.mxu0 0
      %873 = vmatprep.subr.bf16.mxu0 0
      %874 = vmatpush2.bf16.msra.mxu0 0
      %875 = vmatprep.subr.bf16.mxu0 0
      %876 = vmatpush2.bf16.msra.mxu0 0
      %877 = vmatprep.subr.bf16.mxu0 0
      %878 = vmatpush2.bf16.msra.mxu0 0
      %879 = vmatprep.subr.bf16.mxu0 0
      %880 = vmatpush2.bf16.msra.mxu0 0
      %881 = vmatprep.subr.bf16.mxu0 0
      %882 = vmatpush2.bf16.msra.mxu0 0
      %883 = vmatprep.mubr.bf16.mxu0 0
      %884 = vmatmul.mubr.bf16.gmra.mxu0 %v772
      %v885 = vpop.f32.mrf.mxu0
      %v886 = vadd.f32 %v801, %v885
      %v887 = vpop.f32.mrf.mxu0
      %v888 = vpop.f32.mrf.mxu0
      %v889 = vadd.f32 %v801, %v888
      %v890 = vpop.f32.mrf.mxu0
      %891 = vmatprep.mubr.bf16.mxu0 0
      %892 = vmatmul.mubr.bf16.gmra.mxu0 %v773
      %v893 = vpop.f32.mrf.mxu0
      %v894 = vadd.f32 %v801, %v893
      %v895 = vpop.f32.mrf.mxu0
      %v896 = vpop.f32.mrf.mxu0
      %v897 = vadd.f32 %v801, %v896
      %v898 = vpop.f32.mrf.mxu0
      %899 = vmatprep.mubr.bf16.mxu0 0
      %900 = vmatmul.mubr.bf16.gmra.mxu0 %v774
      %v901 = vpop.f32.mrf.mxu0
      %v902 = vadd.f32 %v801, %v901
      %v903 = vpop.f32.mrf.mxu0
      %v904 = vpop.f32.mrf.mxu0
      %v905 = vadd.f32 %v801, %v904
      %v906 = vpop.f32.mrf.mxu0
      %907 = vmatprep.mubr.bf16.mxu0 0
      %908 = vmatmul.mubr.bf16.gmra.mxu0 %v775
      %v909 = vpop.f32.mrf.mxu0
      %v910 = vadd.f32 %v801, %v909
      %v911 = vpop.f32.mrf.mxu0
      %v912 = vpop.f32.mrf.mxu0
      %v913 = vadd.f32 %v801, %v912
      %v914 = vpop.f32.mrf.mxu0
      %915 = vmatprep.mubr.bf16.mxu0 0
      %916 = vmatmul.mubr.bf16.gmra.mxu0 %v776
      %v917 = vpop.f32.mrf.mxu0
      %v918 = vadd.f32 %v801, %v917
      %v919 = vpop.f32.mrf.mxu0
      %v920 = vpop.f32.mrf.mxu0
      %v921 = vadd.f32 %v801, %v920
      %v922 = vpop.f32.mrf.mxu0
      %923 = vmatprep.mubr.bf16.mxu0 0
      %924 = vmatmul.mubr.bf16.gmra.mxu0 %v777
      %v925 = vpop.f32.mrf.mxu0
      %v926 = vadd.f32 %v801, %v925
      %v927 = vpop.f32.mrf.mxu0
      %v928 = vpop.f32.mrf.mxu0
      %v929 = vadd.f32 %v801, %v928
      %v930 = vpop.f32.mrf.mxu0
      %931 = vmatprep.mubr.bf16.mxu0 0
      %932 = vmatmul.mubr.bf16.gmra.mxu0 %v778
      %v933 = vpop.f32.mrf.mxu0
      %v934 = vadd.f32 %v801, %v933
      %v935 = vpop.f32.mrf.mxu0
      %v936 = vpop.f32.mrf.mxu0
      %v937 = vadd.f32 %v801, %v936
      %v938 = vpop.f32.mrf.mxu0
      %939 = vmatprep.mubr.bf16.mxu0 0
      %940 = vmatmul.mubr.bf16.gmra.mxu0 %v779
      %v941 = vpop.f32.mrf.mxu0
      %v942 = vadd.f32 %v801, %v941
      %v943 = vpop.f32.mrf.mxu0
      %v944 = vpop.f32.mrf.mxu0
      %v945 = vadd.f32 %v801, %v944
      %v946 = vpop.f32.mrf.mxu0
      %947 = vdwg.mxu0
      %948 = vst [vmem:[%s280] sm:$0xff] %v886
      %949 = vst [vmem:[%s280 + $0x8] sm:$0xff] %v889
      %950 = vst [vmem:[%s280 + $0x10] sm:$0xff] %v894
      %951 = vst [vmem:[%s280 + $0x18] sm:$0xff] %v897
      %952 = vst [vmem:[%s280 + $0x20] sm:$0xff] %v902
      %953 = vst [vmem:[%s280 + $0x28] sm:$0xff] %v905
      %954 = vst [vmem:[%s280 + $0x30] sm:$0xff] %v910
      %955 = vst [vmem:[%s280 + $0x38] sm:$0xff] %v913
      %956 = vst [vmem:[%s280 + $0x40] sm:$0xff] %v918
      %957 = vst [vmem:[%s280 + $0x48] sm:$0xff] %v921
      %958 = vst [vmem:[%s280 + $0x50] sm:$0xff] %v926
      %959 = vst [vmem:[%s280 + $0x58] sm:$0xff] %v929
      %960 = vst [vmem:[%s280 + $0x60] sm:$0xff] %v934
      %961 = vst [vmem:[%s280 + $0x68] sm:$0xff] %v937
      %962 = vst [vmem:[%s280 + $0x70] sm:$0xff] %v942
      %963 = vst [vmem:[%s280 + $0x78] sm:$0xff] %v945
      %s964 = smul.u32 16, %s18
      %p965 = scmp.lt.s32.totalorder %s964, 31
      %s966 = scalar_select %p965, %s964, 31
      %s967 = smul.addr %s966, 8
      %s968 = scalar_lea.vmem %s7, %s967
      // Predicated region
      $region49: #{a2c_lstm_forward.1} parent=47 // pred_check
        %p969 = pneg %p188
      $region50: #{a2c_lstm_forward.1} parent=47 // pred_check_branch
        %971 = sbr.rel (%p969) target = $region52
      $region51: #{a2c_lstm_forward.1} parent=47 // pred_region
        %s972 = smul.u32 16, %s18
      $region52: #{a2c_lstm_forward.1} parent=47 // pred_fallthru
        _
    $region48: #{a2c_lstm_forward.1} parent=5 // pred_fallthru
      _
    %p973 = scmp.le.s32.totalorder 2, %s13
    // Predicated region
    $region53: #{a2c_lstm_forward.1} parent=5 // pred_check
      %p974 = pneg %p973
    $region54: #{a2c_lstm_forward.1} parent=5 // pred_check_branch
      %976 = sbr.rel (%p974) target = $region56
    $region55: #{a2c_lstm_forward.1} parent=5 // pred_region
      %s977 = ssub.s32 %s13, 2
      // Predicated region
      $region57: #{a2c_lstm_forward.1} parent=55 // pred_check
        %p978 = pneg %p194
      $region58: #{a2c_lstm_forward.1} parent=55 // pred_check_branch
        %980 = sbr.rel (%p978) target = $region60
      $region59: #{a2c_lstm_forward.1} parent=55 // pred_region
        %s981 = smul.u32 16, %s19
        %p982 = scmp.lt.s32.totalorder %s981, 31
        %s983 = scalar_select %p982, %s981, 31
        %s984 = smul.addr %s983, 8
        %s985 = scalar_lea.vmem %s7, %s984
      $region60: #{a2c_lstm_forward.1} parent=55 // pred_fallthru
        _
    $region56: #{a2c_lstm_forward.1} parent=5 // pred_fallthru
      _
  $region6: #{a2c_lstm_forward.1} parent=0 // loop_footer
    %s17 = sadd.s32 1, %s13
  $region7: #{a2c_lstm_forward.1} parent=0 // loop_footer_branch
    %12 = sbr.rel target = $region3
  $region8: #{a2c_lstm_forward.1} parent=0 // loop_exit
    _

</llo_original>
